<compile_context>
chip_gen: v7x
topology: tpu7x:2x2x1
jax: 0.10.0
libtpu: 0.0.40
codegen_flags: <defaults>
</compile_context>

<pallas_src>
import math

import jax
import jax.numpy as jnp
from jax.experimental import pallas as pl
from jax.experimental.pallas import tpu as pltpu

EPS = 1e-5  # matches F.layer_norm default


def _ln_kernel(x_ref, g_ref, o_ref):
    # x_ref: (TILE_ROWS, D), g_ref: (1, D) already f32
    x = x_ref[...].astype(jnp.float32)
    inv_d = 1.0 / x.shape[-1]
    mean = jnp.sum(x, axis=-1, keepdims=True) * inv_d
    xc = x - mean
    var = jnp.sum(xc * xc, axis=-1, keepdims=True) * inv_d  # two-pass: numerically safe
    inv = jax.lax.rsqrt(var + EPS)
    o_ref[...] = ((xc * inv) * g_ref[...]).astype(o_ref.dtype)


def _ln_kernel_beta(x_ref, g_ref, b_ref, o_ref):
    x = x_ref[...].astype(jnp.float32)
    inv_d = 1.0 / x.shape[-1]
    mean = jnp.sum(x, axis=-1, keepdims=True) * inv_d
    xc = x - mean
    var = jnp.sum(xc * xc, axis=-1, keepdims=True) * inv_d
    inv = jax.lax.rsqrt(var + EPS)
    o_ref[...] = ((xc * inv) * g_ref[...] + b_ref[...]).astype(o_ref.dtype)


def _round_up(x, m):
    return ((x + m - 1) // m) * m


def _vmem_budget_and_limit():
    """Generation-aware VMEM sizing. v7x: 64 MiB physical -> 44 MiB limit.
    v5e/v6e: 128 MiB physical -> 64 MiB limit. Budget keeps headroom for
    compiler-internal scratch."""
    phys = 128 * 1024 * 1024
    try:
        phys = pltpu.get_tpu_info().vmem_capacity_bytes
    except Exception:
        pass
    if phys <= 64 * 1024 * 1024:      # v7x-class
        limit = 44 * 1024 * 1024
    else:                             # v5e / v6e
        limit = 64 * 1024 * 1024
    budget = (limit * 3) // 4
    return budget, limit


def _pick_tile_rows(rows, dim, itemsize, budget):
    """Row tile sizing:
      * working set per row = 2x in + 2x out (double-buffered, input dtype)
        + ~3 full-tile f32 temporaries  ->  dim*(4*itemsize + 12) bytes
      * aim for a ~8 MiB input block (per-step overhead amortization)
      * keep >= 4 grid steps when rows allow it (v7x dual-core + prefetch overlap)
      * round to the dtype sublane packing (8 f32 / 16 bf16 / 32 int8)."""
    packing = max(1, 4 // itemsize)
    sublane = 8 * packing
    per_row = dim * (4 * itemsize + 12)
    cap = max(sublane, budget // per_row)
    target_rows = max(sublane, (8 * 1024 * 1024) // (dim * itemsize))
    tile = min(cap, target_rows, _round_up(rows, sublane))
    if rows >= 4 * sublane:
        tile = min(tile, _round_up(-(-rows // 4), sublane))
    tile = max(sublane, (tile // sublane) * sublane)
    return tile


def layer_norm_pallas(x, gamma, beta=None, *, tile_rows=None):
    """LayerNorm over the last dim of x, equivalent to
    F.layer_norm(x, x.shape[-1:], gamma, beta) with eps=1e-5.
    If beta is None it is treated as zeros (as in the source module's buffer)."""
    orig_shape = x.shape
    dim = orig_shape[-1]
    rows = math.prod(orig_shape[:-1]) if len(orig_shape) > 1 else 1
    x2 = x.reshape(rows, dim)
    g2 = gamma.astype(jnp.float32).reshape(1, dim)   # hoist cast out of the kernel

    itemsize = jnp.dtype(x.dtype).itemsize
    budget, vmem_limit = _vmem_budget_and_limit()
    if tile_rows is None:
        tile_rows = _pick_tile_rows(rows, dim, itemsize, budget)

    grid = (pl.cdiv(rows, tile_rows),)

    in_specs = [
        pl.BlockSpec((tile_rows, dim), lambda i: (i, 0)),
        pl.BlockSpec((1, dim), lambda i: (0, 0)),
    ]
    args = (x2, g2)
    kernel = _ln_kernel
    if beta is not None:
        in_specs.append(pl.BlockSpec((1, dim), lambda i: (0, 0)))
        args = (x2, g2, beta.astype(jnp.float32).reshape(1, dim))
        kernel = _ln_kernel_beta

    cost = pl.CostEstimate(
        flops=8 * rows * dim,
        transcendentals=rows,
        bytes_accessed=2 * rows * dim * itemsize + dim * 4,
    )

    out = pl.pallas_call(
        kernel,
        out_shape=jax.ShapeDtypeStruct((rows, dim), x.dtype),
        grid_spec=pltpu.PrefetchScalarGridSpec(
            num_scalar_prefetch=0,
            grid=grid,
            in_specs=in_specs,
            out_specs=pl.BlockSpec((tile_rows, dim), lambda i: (i, 0)),
        ),
        compiler_params=pltpu.CompilerParams(
            dimension_semantics=("parallel",),
            vmem_limit_bytes=vmem_limit,
        ),
        cost_estimate=cost,
    )(*args)

    return out.reshape(orig_shape)


class LayerNormPallas:
    """Mirror of the PyTorch module: gamma = ones(dim) parameter, beta = zeros(dim) buffer.
    beta is identically zero, so it is not fed to the kernel (saves one input stream)."""

    def __init__(self, dim):
        self.gamma = jnp.ones((dim,), jnp.float32)
        self.beta = jnp.zeros((dim,), jnp.float32)

    def __call__(self, x):
        return layer_norm_pallas(x, self.gamma, beta=None)


def _ref_layer_norm(x, gamma, beta):
    xf = x.astype(jnp.float32)
    mean = jnp.mean(xf, axis=-1, keepdims=True)
    var = jnp.mean((xf - mean) ** 2, axis=-1, keepdims=True)
    y = (xf - mean) * jax.lax.rsqrt(var + EPS) * gamma.astype(jnp.float32)
    if beta is not None:
        y = y + beta.astype(jnp.float32)
    return y.astype(x.dtype)


if __name__ == "__main__":
    key = jax.random.PRNGKey(0)

    # Case 1: module-consistent small shape, f32 (lane-masked path for D=32).
    batch, seq, hidden = 2, 8, 32
    x = jax.random.normal(key, (batch, seq, hidden), dtype=jnp.float32)
    ln = LayerNormPallas(hidden)
    y = jax.block_until_ready(ln(x))
    ref = _ref_layer_norm(x, ln.gamma, None)
    assert jnp.allclose(y, ref, atol=1e-5, rtol=1e-5)

    # Case 2: ragged rows (not a multiple of the tile) + explicit beta path, f32.
    x2 = jax.random.normal(jax.random.PRNGKey(1), (3, 5, hidden), dtype=jnp.float32)
    beta = jax.random.normal(jax.random.PRNGKey(2), (hidden,), dtype=jnp.float32)
    y2 = jax.block_until_ready(layer_norm_pallas(x2, ln.gamma, beta))
    ref2 = _ref_layer_norm(x2, ln.gamma, beta)
    assert jnp.allclose(y2, ref2, atol=1e-5, rtol=1e-5)

    # Case 3: bf16 input, lane-dense D (multiple of 128), rows not a multiple of sublane.
    d3 = 256
    x3 = jax.random.normal(jax.random.PRNGKey(3), (2, 13, d3), dtype=jnp.float32)
    x3 = (x3 + 3.0).astype(jnp.bfloat16)  # un-centered rows: exercises two-pass variance
    g3 = jnp.ones((d3,), jnp.float32)
    y3 = jax.block_until_ready(layer_norm_pallas(x3, g3, None))
    ref3 = _ref_layer_norm(x3, g3, None)
    assert jnp.allclose(y3.astype(jnp.float32), ref3.astype(jnp.float32), atol=2e-2, rtol=2e-2)

    print("KERNEL_OK")
</pallas_src>

<mosaic_0001>
module attributes {stable_mosaic.version = 11 : i64} {
  func.func @_ln_kernel(%arg0: i32, %arg1: memref<16x32xf32, #tpu.memory_space<vmem>>, %arg2: memref<1x32xf32, #tpu.memory_space<vmem>>, %arg3: memref<16x32xf32, #tpu.memory_space<vmem>>) attributes {dimension_semantics = [#tpu.dimension_semantics<parallel>], iteration_bounds = array<i64: 1>, scalar_prefetch = 0 : i64, scratch_operands = 0 : i64, tpu.core_type = #tpu.core_type<tc>, window_params = [{transform_indices = @transform_0, window_bounds = array<i64: 16, 32>}, {pipeline_mode = #tpu.pipeline_mode<synchronous>, transform_indices = @transform_1, window_bounds = array<i64: 1, 32>}, {transform_indices = @transform_2, window_bounds = array<i64: 16, 32>}]} {
    %c0 = arith.constant 0 : index
    %c0_0 = arith.constant 0 : index
    %0 = vector.load %arg1[%c0, %c0_0] : memref<16x32xf32, #tpu.memory_space<vmem>>, vector<16x32xf32>
    %cst = arith.constant dense<0.000000e+00> : vector<16xf32>
    %1 = vector.multi_reduction <add>, %0, %cst [1] : vector<16x32xf32> to vector<16xf32>
    %2 = vector.shape_cast %1 : vector<16xf32> to vector<16x1xf32>
    %cst_1 = arith.constant 3.125000e-02 : f32
    %3 = vector.broadcast %cst_1 : f32 to vector<16x1xf32>
    %4 = arith.mulf %2, %3 : vector<16x1xf32>
    %5 = vector.broadcast %4 : vector<16x1xf32> to vector<16x32xf32>
    %6 = arith.subf %0, %5 : vector<16x32xf32>
    %7 = arith.mulf %6, %6 : vector<16x32xf32>
    %cst_2 = arith.constant dense<0.000000e+00> : vector<16xf32>
    %8 = vector.multi_reduction <add>, %7, %cst_2 [1] : vector<16x32xf32> to vector<16xf32>
    %9 = vector.shape_cast %8 : vector<16xf32> to vector<16x1xf32>
    %cst_3 = arith.constant 3.125000e-02 : f32
    %10 = vector.broadcast %cst_3 : f32 to vector<16x1xf32>
    %11 = arith.mulf %9, %10 : vector<16x1xf32>
    %cst_4 = arith.constant 9.99999974E-6 : f32
    %12 = vector.broadcast %cst_4 : f32 to vector<16x1xf32>
    %13 = arith.addf %11, %12 : vector<16x1xf32>
    %14 = math.rsqrt %13 : vector<16x1xf32>
    %15 = vector.broadcast %14 : vector<16x1xf32> to vector<16x32xf32>
    %16 = arith.mulf %6, %15 : vector<16x32xf32>
    %c0_5 = arith.constant 0 : index
    %c0_6 = arith.constant 0 : index
    %17 = vector.load %arg2[%c0_5, %c0_6] : memref<1x32xf32, #tpu.memory_space<vmem>>, vector<1x32xf32>
    %18 = vector.broadcast %17 : vector<1x32xf32> to vector<16x32xf32>
    %19 = arith.mulf %16, %18 : vector<16x32xf32>
    %c0_7 = arith.constant 0 : index
    %c0_8 = arith.constant 0 : index
    %20 = vector.load %arg3[%c0_7, %c0_8] : memref<16x32xf32, #tpu.memory_space<vmem>>, vector<16x32xf32>
    tpu.vector_store %arg3[%c0_7, %c0_8], %19 {strides = array<i32>} : memref<16x32xf32, #tpu.memory_space<vmem>>, vector<16x32xf32>,
    return
  }
  func.func @transform_0(%arg0: i32) -> (i32, i32) {
    %c0_i32 = arith.constant 0 : i32
    %c0_i32_0 = arith.constant 0 : i32
    return %arg0, %c0_i32 : i32, i32
  }
  func.func @transform_1(%arg0: i32) -> (i32, i32) {
    %c0_i32 = arith.constant 0 : i32
    %c0_i32_0 = arith.constant 0 : i32
    %c0_i32_1 = arith.constant 0 : i32
    return %c0_i32, %c0_i32_0 : i32, i32
  }
  func.func @transform_2(%arg0: i32) -> (i32, i32) {
    %c0_i32 = arith.constant 0 : i32
    %c0_i32_0 = arith.constant 0 : i32
    return %arg0, %c0_i32 : i32, i32
  }
}

</mosaic_0001>

<llo_original>
// kernel: tpu_custom_call.1
$region0: #{tpu_custom_call.1}
  #allocation0 [shape = 'u32[]', space=smem, size = 0x4, offset = 0x4, fixed_abs, tag = 'smem constant byte address 0x4 - core index']
  #allocation1 [shape = 'u32[144,128]{1,0:T(1,128)}', space=vmem, size = 0x12000, scoped, tag = 'internal scratch']
  %s0 = inlined_call_operand.hbm [shape: f32[16,32], index: 0, kind: input, shape index: {}]
  %s1 = inlined_call_operand.hbm [shape: f32[1,32], index: 1, kind: input, shape index: {}]
  %s2 = inlined_call_operand.hbm [shape: f32[16,32], index: 2, kind: output, shape index: {}]
  %s3 = sld [smem:[#allocation0]]
  $region26: #{tpu_custom_call.1} parent=0
    _
  %s5 = ssub.s32 1, %s3
  %s6 = scalar_select 0, %s5, %s3
  $region1: #{tpu_custom_call.1} parent=0
    #allocation2 [shape = 'u8[8192]{0}', space=vmem, size = 0x2000, scoped, tag = 'input window, operand 0, single buffered']
    #allocation3 [shape = 's32[1]{0}', space=sflag, size = 0x4, scoped, tag = 'scoped memory for tpu_custom_call.1']
    #allocation4 [shape = 's32[1]{0}', space=sflag, size = 0x4, scoped, tag = 'scoped memory for tpu_custom_call.1']
    #allocation5 [shape = 'u8[512]{0}', space=vmem, size = 0x400, scoped, tag = 'input window, operand 1, single buffered']
    #allocation6 [shape = 's32[1]{0}', space=sflag, size = 0x4, scoped, tag = 'scoped memory for tpu_custom_call.1']
    #allocation7 [shape = 'u8[8192]{0}', space=vmem, size = 0x2000, scoped, tag = 'output window, operand 0, single buffered']
    %7 = vsyncpa [#allocation3], 0
    %8 = vsyncpa [#allocation6], 0
    %9 = vsyncpa [#allocation4], 0
    // Predicated region
    $region2: #{tpu_custom_call.1} parent=1 // pred_check
      _
    $region3: #{tpu_custom_call.1} parent=1 // pred_check_branch
      %11 = sbr.rel (0) target = $region5
    $region4: #{tpu_custom_call.1} parent=1 // pred_region
      %s13 = ssub.s32 256, 256
      %14 = vsyncadd [#allocation3], %s13
      %s15 = sshll.u32 [#allocation2], 4
      %s16 = int_to_ptr.vmem [resolvable:$true] %s15
      %21 = dma.hbm_to_vmem [thread:$0]  %s0, 256, %s16, [#allocation3], 128, 128, 8
    $region5: #{tpu_custom_call.1} parent=1 // pred_fallthru
      _
    // Predicated region
    $region6: #{tpu_custom_call.1} parent=1 // pred_check
      _
    $region7: #{tpu_custom_call.1} parent=1 // pred_check_branch
      %23 = sbr.rel (0) target = $region9
    $region8: #{tpu_custom_call.1} parent=1 // pred_region
      %s25 = ssub.s32 16, 16
      %26 = vsyncadd [#allocation6], %s25
      %s28 = sshll.u32 [#allocation5], 4
      %s29 = int_to_ptr.vmem [resolvable:$true] %s28
      %31 = dma.hbm_to_vmem [thread:$0]  %s1, 16, %s29, [#allocation6]
    $region9: #{tpu_custom_call.1} parent=1 // pred_fallthru
      _
    // Predicated region
    $region10: #{tpu_custom_call.1} parent=1 // pred_check
      _
    $region11: #{tpu_custom_call.1} parent=1 // pred_check_branch
      %33 = sbr.rel (0) target = $region13
    $region12: #{tpu_custom_call.1} parent=1 // pred_region
      %34 = dma.done [#allocation3], 256
    $region13: #{tpu_custom_call.1} parent=1 // pred_fallthru
      _
    // Predicated region
    $region14: #{tpu_custom_call.1} parent=1 // pred_check
      _
    $region15: #{tpu_custom_call.1} parent=1 // pred_check_branch
      %36 = sbr.rel (0) target = $region17
    $region16: #{tpu_custom_call.1} parent=1 // pred_region
      %37 = dma.done [#allocation6], 16
    $region17: #{tpu_custom_call.1} parent=1 // pred_fallthru
      _
    %v38 = vld [vmem:[#allocation2] sm:$0xff]
    %v39 = vld [vmem:[#allocation2 + $0x8] sm:$0xff]
    %vm40 = vcmask 261120
    %v41 = vsel %vm40, %v38, 0.0
    %42 = vadd.xlane.f32.xlu0 %v41
    %v43 = vpop.xlane.xlu0 %42
    %v44 = vsel %vm40, %v39, 0.0
    %45 = vadd.xlane.f32.xlu0 %v44
    %v46 = vpop.xlane.xlu0 %45
    %v47 = vmul.f32 %v43, 0.03125
    %v48 = vmul.f32 %v46, 0.03125
    %v49 = vsub.f32 %v38, %v47
    %v50 = vsub.f32 %v39, %v48
    %v51 = vmul.f32 %v49, %v49
    %v52 = vmul.f32 %v50, %v50
    %v53 = vsel %vm40, %v51, 0.0
    %54 = vadd.xlane.f32.xlu0 %v53
    %v55 = vpop.xlane.xlu0 %54
    %v56 = vsel %vm40, %v52, 0.0
    %57 = vadd.xlane.f32.xlu0 %v56
    %v58 = vpop.xlane.xlu0 %57
    %v59 = vmul.f32 %v55, 0.03125
    %v60 = vmul.f32 %v58, 0.03125
    %v61 = vadd.f32 %v59, 1e-05
    %v62 = vadd.f32 %v60, 1e-05
    %v63 = vrsqrt.pop %v61
    %v64 = vrsqrt.pop %v62
    %v65 = vmul.f32 %v49, %v63
    %v66 = vmul.f32 %v50, %v64
    %v67 = vld [vmem:[#allocation5] sm:$0x1]
    %v69 = vlaneseq
    %v70 = vshrl.u32 %v69, 7
    %v71 = vsub.s32 0, %v70
    %v72 = vrot.slane %v67, %v71
    %v74 = vmul.f32 %v65, %v72
    %v75 = vmul.f32 %v66, %v72
    %76 = vst.msk [vmem:[#allocation7] sm:$0xff] %vm40, %v74
    %77 = vst.msk [vmem:[#allocation7 + $0x8] sm:$0xff] %vm40, %v75
    // Predicated region
    $region18: #{tpu_custom_call.1} parent=1 // pred_check
      _
    $region19: #{tpu_custom_call.1} parent=1 // pred_check_branch
      %79 = sbr.rel (0) target = $region21
    $region20: #{tpu_custom_call.1} parent=1 // pred_region
      %s81 = ssub.s32 256, 256
      %82 = vsyncadd [#allocation4], %s81
      %s83 = sshll.u32 [#allocation7], 4
      %s84 = int_to_ptr.vmem [resolvable:$true] %s83
      %89 = dma.vmem_to_hbm [thread:$0]  %s84, 256, %s2, [#allocation4], 128, 128, 8
    $region21: #{tpu_custom_call.1} parent=1 // pred_fallthru
      _
    // Predicated region
    $region22: #{tpu_custom_call.1} parent=1 // pred_check
      _
    $region23: #{tpu_custom_call.1} parent=1 // pred_check_branch
      %91 = sbr.rel (0) target = $region25
    $region24: #{tpu_custom_call.1} parent=1 // pred_region
      %92 = dma.done [#allocation4], 256
    $region25: #{tpu_custom_call.1} parent=1 // pred_fallthru
      _
    %93 = vsyncpa [#allocation3], 1
    %94 = vsyncpa [#allocation6], 1
    %95 = vsyncpa [#allocation4], 1

</llo_original>
